<compile_context>
chip_gen: v7x
topology: tpu7x:2x2x1
jax: 0.10.0
libtpu: 0.0.40
codegen_flags: <defaults>
</compile_context>

<pallas_src>
import functools

import jax
import jax.numpy as jnp
from jax.experimental import pallas as pl
from jax.experimental.pallas import tpu as pltpu


_LANE = 128
_SUBLANE = 8


def _round_up(x, m):
    return (x + m - 1) // m * m


def _pad2(a, rows, cols):
    pr, pc = rows - a.shape[0], cols - a.shape[1]
    if pr or pc:
        a = jnp.pad(a, ((0, pr), (0, pc)))
    return a


def _vmem_capacity_bytes():
    try:
        return int(pltpu.get_tpu_info().vmem_capacity_bytes)
    except Exception:
        return 128 * 1024 * 1024


def _ffn_kernel(x_ref, w1_ref, w2_ref, w3_ref, gamma_ref, beta_ref, *rest,
                eps, d_valid, has_mask):
    # x_ref:      (tm, Dp)   current token tile, native dtype (padded lanes = 0)
    # w1/w2_ref:  (Dp, tf)   bf16 weight slices for this F-chunk
    # w3_ref:     (tf, Dp)   bf16 weight slice for this F-chunk
    # gamma/beta: (1, Dp)    LayerNorm affine params (f32, padded lanes = 0)
    # rest:       (mask_ref?, o_ref, acc_ref)
    if has_mask:
        mask_ref, o_ref, acc_ref = rest
    else:
        o_ref, acc_ref = rest

    k = pl.program_id(1)
    nk = pl.num_programs(1)

    @pl.when(k == 0)
    def _():
        acc_ref[...] = jnp.zeros_like(acc_ref)

    # Per-F-chunk gate + down-projection, f32 accumulation into VMEM scratch.
    x_bf = x_ref[...].astype(jnp.bfloat16)
    a = jnp.dot(x_bf, w1_ref[...], preferred_element_type=jnp.float32)   # fc_1
    b = jnp.dot(x_bf, w2_ref[...], preferred_element_type=jnp.float32)   # fc_2
    gated = (b * jax.nn.sigmoid(b)) * a                                  # silu(fc_2)*fc_1
    acc_ref[...] += jnp.dot(gated.astype(jnp.bfloat16), w3_ref[...],
                            preferred_element_type=jnp.float32)

    @pl.when(k == nk - 1)
    def _():
        # Post-norm residual: LayerNorm(h + mlp(h)).
        y = x_ref[...].astype(jnp.float32) + acc_ref[...]
        d_pad = y.shape[-1]
        inv_d = jnp.float32(1.0 / d_valid)
        if d_pad == d_valid:
            mean = jnp.sum(y, axis=-1, keepdims=True) * inv_d
            centered = y - mean
            var = jnp.sum(centered * centered, axis=-1, keepdims=True) * inv_d
            y_norm = centered * jax.lax.rsqrt(var + eps)
        else:
            # Padded feature lanes of y are exactly 0; exclude them from the
            # (biased) variance via a lane mask.  Runs once per token tile.
            col = jax.lax.broadcasted_iota(jnp.int32, (1, d_pad), 1)
            lane_valid = (col < d_valid).astype(jnp.float32)
            mean = jnp.sum(y, axis=-1, keepdims=True) * inv_d
            centered = (y - mean) * lane_valid
            var = jnp.sum(centered * centered, axis=-1, keepdims=True) * inv_d
            y_norm = (y - mean) * jax.lax.rsqrt(var + eps)
        out = y_norm * gamma_ref[...] + beta_ref[...]
        if has_mask:
            out = out * mask_ref[...].astype(jnp.float32)   # (tm,1) or (tm,Dp)
        o_ref[...] = out.astype(o_ref.dtype)


def feed_forward(h, w1t, w2t, w3t, gamma, beta, mask=None, *,
                 tm=None, tf=512, eps=1e-5):
    """h: (B, S, D).  w1t/w2t: (D, F), w3t: (F, D).  Returns (B, S, D)."""
    B, S, D = h.shape
    F = w1t.shape[1]
    assert w1t.shape == (D, F) and w2t.shape == (D, F) and w3t.shape == (F, D)

    N = B * S
    vmem_cap = _vmem_capacity_bytes()

    # Token tile: 512 on 128 MiB parts (v5e/v6e), 256 on v7x-class (64 MiB).
    if tm is None:
        tm = 512 if vmem_cap >= 96 * 1024 * 1024 else 256
    tm = _round_up(max(_SUBLANE, min(tm, _round_up(N, _SUBLANE))), _SUBLANE)
    Np = _round_up(N, tm)

    Dp = _round_up(D, _LANE)                       # lane-dense feature axis
    # F-chunk size: multiple of 128, chosen to minimize padding of F.
    Fp128 = _round_up(F, _LANE)
    tf = max(_LANE, min(_round_up(tf, _LANE), Fp128))
    nk = pl.cdiv(Fp128, tf)
    tf = _round_up(pl.cdiv(Fp128, nk), _LANE)
    Fp = tf * nk

    # Activations: tokens-major 2D, native dtype, padded only if needed.
    x = h.reshape(N, D)
    x = _pad2(x, Np, Dp)

    # Weights: bf16 MXU operands, zero-padded so padded F-columns contribute 0.
    w1p = _pad2(w1t, Dp, Fp).astype(jnp.bfloat16)
    w2p = _pad2(w2t, Dp, Fp).astype(jnp.bfloat16)
    w3p = _pad2(w3t, Fp, Dp).astype(jnp.bfloat16)
    gamma_p = _pad2(gamma.reshape(1, D).astype(jnp.float32), 1, Dp)
    beta_p = _pad2(beta.reshape(1, D).astype(jnp.float32), 1, Dp)

    has_mask = mask is not None
    per_token_mask = False
    tok_spec = pl.BlockSpec((tm, Dp), lambda i, k: (i, 0))
    resident = pl.BlockSpec(memory_space=pltpu.MemorySpace.VMEM)

    inputs = [x, w1p, w2p, w3p, gamma_p, beta_p]
    in_specs = [
        tok_spec,
        pl.BlockSpec((Dp, tf), lambda i, k: (0, k)),
        pl.BlockSpec((Dp, tf), lambda i, k: (0, k)),
        pl.BlockSpec((tf, Dp), lambda i, k: (k, 0)),
        resident,
        resident,
    ]
    if has_mask:
        m = jnp.asarray(mask, dtype=jnp.float32)
        per_token_mask = (m.ndim == 0) or (m.shape[-1] == 1)
        if per_token_mask:
            # Per-token mask: DMA as an (Np, 1) column, broadcast in-kernel.
            mcol = jnp.broadcast_to(m, (B, S, 1)).reshape(N, 1)
            inputs.append(_pad2(mcol, Np, 1))
            in_specs.append(pl.BlockSpec((tm, 1), lambda i, k: (i, 0)))
        else:
            # Per-feature mask: fall back to the full (Np, Dp) layout.
            mfull = jnp.broadcast_to(m, (B, S, D)).reshape(N, D)
            inputs.append(_pad2(mfull, Np, Dp))
            in_specs.append(tok_spec)

    kernel = functools.partial(_ffn_kernel, eps=eps, d_valid=D,
                               has_mask=has_mask)

    # VMEM budget from actual buffer sizes (double-buffered blocked inputs,
    # resident affine params, accumulator scratch, live f32 intermediates).
    isz = h.dtype.itemsize
    mask_cols = (1 if per_token_mask else Dp) if has_mask else 0
    bytes_needed = (
        2 * tm * Dp * isz                 # x double buffer
        + 2 * 2 * Dp * tf * 2             # w1 + w2 chunks (bf16)
        + 2 * tf * Dp * 2                 # w3 chunk (bf16)
        + 2 * tm * Dp * isz               # output double buffer
        + tm * Dp * 4                     # f32 accumulator scratch
        + 2 * Dp * 4                      # gamma + beta resident
        + 3 * tm * tf * 4                 # a, b, gated live intermediates
        + 2 * tm * mask_cols * 4          # mask tile (if any)
    )
    vmem_limit = int(min(vmem_cap,
                         max(int(bytes_needed * 1.5), 32 * 1024 * 1024)))

    cost = pl.CostEstimate(
        flops=int(6 * N * D * F + 10 * N * D),
        transcendentals=int(N * F),
        bytes_accessed=int(2 * N * D * isz + 3 * D * F * 2 + 2 * D * 4
                           + (N * 4 * (1 if per_token_mask else D)
                              if has_mask else 0)),
    )

    out = pl.pallas_call(
        kernel,
        out_shape=jax.ShapeDtypeStruct((Np, Dp), h.dtype),
        grid_spec=pltpu.PrefetchScalarGridSpec(
            num_scalar_prefetch=0,
            grid=(Np // tm, Fp // tf),          # token tiles outer, F inner
            in_specs=in_specs,
            out_specs=pl.BlockSpec((tm, Dp), lambda i, k: (i, 0)),
            scratch_shapes=[pltpu.VMEM((tm, Dp), jnp.float32)],
        ),
        compiler_params=pltpu.CompilerParams(
            dimension_semantics=("parallel", "arbitrary"),
            vmem_limit_bytes=vmem_limit,
        ),
        cost_estimate=cost,
    )(*inputs)

    if Np != N or Dp != D:
        out = out[:N, :D]
    return out.reshape(B, S, D)


def _reference(h, w1t, w2t, w3t, gamma, beta, eps=1e-5, mirror_bf16=True):
    """Pure-JAX reference.  mirror_bf16=True mimics the kernel's bf16 MXU operands."""
    x = h.astype(jnp.float32)
    if mirror_bf16:
        xm = x.astype(jnp.bfloat16).astype(jnp.float32)
        w1 = w1t.astype(jnp.bfloat16).astype(jnp.float32)
        w2 = w2t.astype(jnp.bfloat16).astype(jnp.float32)
        w3 = w3t.astype(jnp.bfloat16).astype(jnp.float32)
    else:
        xm, w1, w2, w3 = x, w1t, w2t, w3t
    a = xm @ w1
    b = xm @ w2
    gated = jax.nn.silu(b) * a
    if mirror_bf16:
        gated = gated.astype(jnp.bfloat16).astype(jnp.float32)
    mlp = gated @ w3
    y = x + mlp
    mean = jnp.mean(y, axis=-1, keepdims=True)
    var = jnp.mean((y - mean) ** 2, axis=-1, keepdims=True)
    return (y - mean) * jax.lax.rsqrt(var + eps) * gamma + beta


if __name__ == "__main__":
    B, S, D_EMBED, D_FFN = 2, 8, 32, 680  # default d_ffn from the module

    key = jax.random.PRNGKey(0)
    k_h, k1, k2, k3, k_m = jax.random.split(key, 5)

    h = jax.random.normal(k_h, (B, S, D_EMBED), dtype=jnp.float32)

    # nn.Linear weight shape is (out, in); we store the transpose (in, out).
    w1t = (jax.random.normal(k1, (D_FFN, D_EMBED), dtype=jnp.float32) * 0.05).T
    w2t = (jax.random.normal(k2, (D_FFN, D_EMBED), dtype=jnp.float32) * 0.05).T
    w3t = (jax.random.normal(k3, (D_EMBED, D_FFN), dtype=jnp.float32) * 0.05).T
    gamma = jnp.ones((D_EMBED,), dtype=jnp.float32)   # LayerNorm weight init
    beta = jnp.zeros((D_EMBED,), dtype=jnp.float32)   # LayerNorm bias init

    # No-mask path.
    out = feed_forward(h, w1t, w2t, w3t, gamma, beta, mask=None)
    out = jax.block_until_ready(out)

    ref_bf16 = _reference(h, w1t, w2t, w3t, gamma, beta, mirror_bf16=True)
    ref_f32 = _reference(h, w1t, w2t, w3t, gamma, beta, mirror_bf16=False)
    assert out.shape == (B, S, D_EMBED)
    assert jnp.allclose(out, ref_bf16, atol=5e-3, rtol=5e-3)   # tight vs bf16-aware ref
    assert jnp.allclose(out, ref_f32, atol=3e-2, rtol=3e-2)    # loose vs pure-f32 ref

    # Masked path (per-token mask, applied in-kernel after the LayerNorm).
    mask = (jax.random.uniform(k_m, (B, S, 1)) > 0.5).astype(jnp.float32)
    out_m = jax.block_until_ready(
        feed_forward(h, w1t, w2t, w3t, gamma, beta, mask=mask))
    assert jnp.allclose(out_m, ref_bf16 * mask, atol=5e-3, rtol=5e-3)

    print("KERNEL_OK")
</pallas_src>

<mosaic_0001>
module attributes {stable_mosaic.version = 11 : i64} {
  func.func @_ffn_kernel(%arg0: i32, %arg1: i32, %arg2: memref<16x128xf32, #tpu.memory_space<vmem>>, %arg3: memref<128x384xbf16, #tpu.memory_space<vmem>>, %arg4: memref<128x384xbf16, #tpu.memory_space<vmem>>, %arg5: memref<384x128xbf16, #tpu.memory_space<vmem>>, %arg6: memref<1x128xf32, #tpu.memory_space<vmem>>, %arg7: memref<1x128xf32, #tpu.memory_space<vmem>>, %arg8: memref<16x128xf32, #tpu.memory_space<vmem>>, %arg9: memref<16x128xf32, #tpu.memory_space<vmem>>) attributes {dimension_semantics = [#tpu.dimension_semantics<parallel>, #tpu.dimension_semantics<arbitrary>], iteration_bounds = array<i64: 1, 2>, scalar_prefetch = 0 : i64, scratch_operands = 1 : i64, tpu.core_type = #tpu.core_type<tc>, window_params = [{transform_indices = @transform_0, window_bounds = array<i64: 16, 128>}, {transform_indices = @transform_1, window_bounds = array<i64: 128, 384>}, {transform_indices = @transform_2, window_bounds = array<i64: 128, 384>}, {transform_indices = @transform_3, window_bounds = array<i64: 384, 128>}, {pipeline_mode = #tpu.pipeline_mode<synchronous>, transform_indices = @transform_4, window_bounds = array<i64: 1, 128>}, {pipeline_mode = #tpu.pipeline_mode<synchronous>, transform_indices = @transform_5, window_bounds = array<i64: 1, 128>}, {transform_indices = @transform_6, window_bounds = array<i64: 16, 128>}]} {
    %c0_i32 = arith.constant 0 : i32
    %0 = arith.cmpi eq, %arg1, %c0_i32 : i32
    %1 = arith.extui %0 : i1 to i32
    %c0_i32_0 = arith.constant 0 : i32
    %2 = arith.cmpi ne, %1, %c0_i32_0 : i32
    scf.if %2 {
      %cst_16 = arith.constant 0.000000e+00 : f32
      %25 = vector.broadcast %cst_16 : f32 to vector<16x128xf32>
      %c0_17 = arith.constant 0 : index
      %c0_18 = arith.constant 0 : index
      %26 = vector.load %arg9[%c0_17, %c0_18] : memref<16x128xf32, #tpu.memory_space<vmem>>, vector<16x128xf32>
      tpu.vector_store %arg9[%c0_17, %c0_18], %25 {strides = array<i32>} : memref<16x128xf32, #tpu.memory_space<vmem>>, vector<16x128xf32>,
    } else {
    }
    %c0 = arith.constant 0 : index
    %c0_1 = arith.constant 0 : index
    %3 = vector.load %arg2[%c0, %c0_1] : memref<16x128xf32, #tpu.memory_space<vmem>>, vector<16x128xf32>
    %4 = arith.truncf %3 : vector<16x128xf32> to vector<16x128xbf16>
    %c0_2 = arith.constant 0 : index
    %c0_3 = arith.constant 0 : index
    %5 = vector.load %arg3[%c0_2, %c0_3] : memref<128x384xbf16, #tpu.memory_space<vmem>>, vector<128x384xbf16>
    %cst = arith.constant dense<0.000000e+00> : vector<16x384xf32>
    %6 = tpu.matmul %4, %5, %cst {dimension_numbers = #tpu.dot_dimension_numbers<[1], [0], [0], [1], [0, 0, 1, 1], [], []>} : vector<16x128xbf16>, vector<128x384xbf16>, vector<16x384xf32> -> vector<16x384xf32>
    %c0_4 = arith.constant 0 : index
    %c0_5 = arith.constant 0 : index
    %7 = vector.load %arg4[%c0_4, %c0_5] : memref<128x384xbf16, #tpu.memory_space<vmem>>, vector<128x384xbf16>
    %cst_6 = arith.constant dense<0.000000e+00> : vector<16x384xf32>
    %8 = tpu.matmul %4, %7, %cst_6 {dimension_numbers = #tpu.dot_dimension_numbers<[1], [0], [0], [1], [0, 0, 1, 1], [], []>} : vector<16x128xbf16>, vector<128x384xbf16>, vector<16x384xf32> -> vector<16x384xf32>
    %9 = arith.negf %8 : vector<16x384xf32>
    %10 = math.exp %9 : vector<16x384xf32>
    %cst_7 = arith.constant 1.000000e+00 : f32
    %11 = vector.broadcast %cst_7 : f32 to vector<16x384xf32>
    %12 = arith.addf %11, %10 : vector<16x384xf32>
    %13 = arith.divf %11, %12 : vector<16x384xf32>
    %14 = arith.mulf %8, %13 : vector<16x384xf32>
    %15 = arith.mulf %14, %6 : vector<16x384xf32>
    %c0_8 = arith.constant 0 : index
    %c0_9 = arith.constant 0 : index
    %16 = vector.load %arg9[%c0_8, %c0_9] : memref<16x128xf32, #tpu.memory_space<vmem>>, vector<16x128xf32>
    %17 = arith.truncf %15 : vector<16x384xf32> to vector<16x384xbf16>
    %c0_10 = arith.constant 0 : index
    %c0_11 = arith.constant 0 : index
    %18 = vector.load %arg5[%c0_10, %c0_11] : memref<384x128xbf16, #tpu.memory_space<vmem>>, vector<384x128xbf16>
    %cst_12 = arith.constant dense<0.000000e+00> : vector<16x128xf32>
    %19 = tpu.matmul %17, %18, %cst_12 {dimension_numbers = #tpu.dot_dimension_numbers<[1], [0], [0], [1], [0, 0, 1, 1], [], []>} : vector<16x384xbf16>, vector<384x128xbf16>, vector<16x128xf32> -> vector<16x128xf32>
    %20 = arith.addf %16, %19 : vector<16x128xf32>
    %c0_13 = arith.constant 0 : index
    %c0_14 = arith.constant 0 : index
    %21 = vector.load %arg9[%c0_13, %c0_14] : memref<16x128xf32, #tpu.memory_space<vmem>>, vector<16x128xf32>
    tpu.vector_store %arg9[%c0_13, %c0_14], %20 {strides = array<i32>} : memref<16x128xf32, #tpu.memory_space<vmem>>, vector<16x128xf32>,
    %c1_i32 = arith.constant 1 : i32
    %22 = arith.cmpi eq, %arg1, %c1_i32 : i32
    %23 = arith.extui %22 : i1 to i32
    %c0_i32_15 = arith.constant 0 : i32
    %24 = arith.cmpi ne, %23, %c0_i32_15 : i32
    scf.if %24 {
      %c0_16 = arith.constant 0 : index
      %c0_17 = arith.constant 0 : index
      %25 = vector.load %arg2[%c0_16, %c0_17] : memref<16x128xf32, #tpu.memory_space<vmem>>, vector<16x128xf32>
      %c0_18 = arith.constant 0 : index
      %c0_19 = arith.constant 0 : index
      %26 = vector.load %arg9[%c0_18, %c0_19] : memref<16x128xf32, #tpu.memory_space<vmem>>, vector<16x128xf32>
      %27 = arith.addf %25, %26 : vector<16x128xf32>
      %28 = tpu.iota {dimensions = array<i32: 1>} : vector<1x128xi32>
      %c32_i32 = arith.constant 32 : i32
      %29 = vector.broadcast %c32_i32 : i32 to vector<1x128xi32>
      %30 = arith.cmpi slt, %28, %29 : vector<1x128xi32>
      %31 = arith.extui %30 : vector<1x128xi1> to vector<1x128xi32>
      %32 = arith.sitofp %31 : vector<1x128xi32> to vector<1x128xf32>
      %cst_20 = arith.constant dense<0.000000e+00> : vector<16xf32>
      %33 = vector.multi_reduction <add>, %27, %cst_20 [1] : vector<16x128xf32> to vector<16xf32>
      %34 = vector.shape_cast %33 : vector<16xf32> to vector<16x1xf32>
      %cst_21 = arith.constant 3.125000e-02 : f32
      %35 = vector.broadcast %cst_21 : f32 to vector<16x1xf32>
      %36 = arith.mulf %34, %35 : vector<16x1xf32>
      %37 = vector.broadcast %36 : vector<16x1xf32> to vector<16x128xf32>
      %38 = arith.subf %27, %37 : vector<16x128xf32>
      %39 = vector.broadcast %32 : vector<1x128xf32> to vector<16x128xf32>
      %40 = arith.mulf %38, %39 : vector<16x128xf32>
      %41 = arith.mulf %40, %40 : vector<16x128xf32>
      %cst_22 = arith.constant dense<0.000000e+00> : vector<16xf32>
      %42 = vector.multi_reduction <add>, %41, %cst_22 [1] : vector<16x128xf32> to vector<16xf32>
      %43 = vector.shape_cast %42 : vector<16xf32> to vector<16x1xf32>
      %cst_23 = arith.constant 3.125000e-02 : f32
      %44 = vector.broadcast %cst_23 : f32 to vector<16x1xf32>
      %45 = arith.mulf %43, %44 : vector<16x1xf32>
      %46 = vector.broadcast %36 : vector<16x1xf32> to vector<16x128xf32>
      %47 = arith.subf %27, %46 : vector<16x128xf32>
      %cst_24 = arith.constant 9.99999974E-6 : f32
      %48 = vector.broadcast %cst_24 : f32 to vector<16x1xf32>
      %49 = arith.addf %45, %48 : vector<16x1xf32>
      %50 = math.rsqrt %49 : vector<16x1xf32>
      %51 = vector.broadcast %50 : vector<16x1xf32> to vector<16x128xf32>
      %52 = arith.mulf %47, %51 : vector<16x128xf32>
      %c0_25 = arith.constant 0 : index
      %c0_26 = arith.constant 0 : index
      %53 = vector.load %arg6[%c0_25, %c0_26] : memref<1x128xf32, #tpu.memory_space<vmem>>, vector<1x128xf32>
      %54 = vector.broadcast %53 : vector<1x128xf32> to vector<16x128xf32>
      %55 = arith.mulf %52, %54 : vector<16x128xf32>
      %c0_27 = arith.constant 0 : index
      %c0_28 = arith.constant 0 : index
      %56 = vector.load %arg7[%c0_27, %c0_28] : memref<1x128xf32, #tpu.memory_space<vmem>>, vector<1x128xf32>
      %57 = vector.broadcast %56 : vector<1x128xf32> to vector<16x128xf32>
      %58 = arith.addf %55, %57 : vector<16x128xf32>
      %c0_29 = arith.constant 0 : index
      %c0_30 = arith.constant 0 : index
      %59 = vector.load %arg8[%c0_29, %c0_30] : memref<16x128xf32, #tpu.memory_space<vmem>>, vector<16x128xf32>
      tpu.vector_store %arg8[%c0_29, %c0_30], %58 {strides = array<i32>} : memref<16x128xf32, #tpu.memory_space<vmem>>, vector<16x128xf32>,
    } else {
    }
    return
  }
  func.func @transform_0(%arg0: i32, %arg1: i32) -> (i32, i32) {
    %c0_i32 = arith.constant 0 : i32
    %c0_i32_0 = arith.constant 0 : i32
    return %arg0, %c0_i32 : i32, i32
  }
  func.func @transform_1(%arg0: i32, %arg1: i32) -> (i32, i32) {
    %c0_i32 = arith.constant 0 : i32
    %c0_i32_0 = arith.constant 0 : i32
    return %c0_i32, %arg1 : i32, i32
  }
  func.func @transform_2(%arg0: i32, %arg1: i32) -> (i32, i32) {
    %c0_i32 = arith.constant 0 : i32
    %c0_i32_0 = arith.constant 0 : i32
    return %c0_i32, %arg1 : i32, i32
  }
  func.func @transform_3(%arg0: i32, %arg1: i32) -> (i32, i32) {
    %c0_i32 = arith.constant 0 : i32
    %c0_i32_0 = arith.constant 0 : i32
    return %arg1, %c0_i32 : i32, i32
  }
  func.func @transform_4(%arg0: i32, %arg1: i32) -> (i32, i32) {
    %c0_i32 = arith.constant 0 : i32
    %c0_i32_0 = arith.constant 0 : i32
    %c0_i32_1 = arith.constant 0 : i32
    return %c0_i32, %c0_i32_0 : i32, i32
  }
  func.func @transform_5(%arg0: i32, %arg1: i32) -> (i32, i32) {
    %c0_i32 = arith.constant 0 : i32
    %c0_i32_0 = arith.constant 0 : i32
    %c0_i32_1 = arith.constant 0 : i32
    return %c0_i32, %c0_i32_0 : i32, i32
  }
  func.func @transform_6(%arg0: i32, %arg1: i32) -> (i32, i32) {
    %c0_i32 = arith.constant 0 : i32
    %c0_i32_0 = arith.constant 0 : i32
    return %arg0, %c0_i32 : i32, i32
  }
}

</mosaic_0001>

<llo_original>
// kernel: tpu_custom_call.1
$region0: #{tpu_custom_call.1}
  #allocation0 [shape = 'u32[]', space=smem, size = 0x4, offset = 0x4, fixed_abs, tag = 'smem constant byte address 0x4 - core index']
  #allocation1 [shape = 'u32[144,128]{1,0:T(1,128)}', space=vmem, size = 0x12000, scoped, tag = 'internal scratch']
  #allocation2 [shape = 'f32[16,128]{1,0:T(8,128)}', space=vmem, size = 0x2000, scoped, tag = 'scratch operand']
  %s0 = inlined_call_operand.hbm [shape: f32[16,128], index: 0, kind: input, shape index: {}]
  %s1 = inlined_call_operand.hbm [shape: bf16[128,768], index: 1, kind: input, shape index: {}]
  %s2 = inlined_call_operand.hbm [shape: bf16[128,768], index: 2, kind: input, shape index: {}]
  %s3 = inlined_call_operand.hbm [shape: bf16[768,128], index: 3, kind: input, shape index: {}]
  %s4 = inlined_call_operand.vmem [shape: f32[1,128], index: 4, kind: input, shape index: {}]
  %s5 = inlined_call_operand.vmem [shape: f32[1,128], index: 5, kind: input, shape index: {}]
  %s6 = inlined_call_operand.hbm [shape: f32[16,128], index: 6, kind: output, shape index: {}]
  %s7 = sld [smem:[#allocation0]]
  $region81: #{tpu_custom_call.1} parent=0
    _
  %s9 = ssub.s32 1, %s7
  %s10 = scalar_select 0, %s9, %s7
  $region1: #{tpu_custom_call.1} parent=0
    #allocation3 [shape = 'u8[8192]{0}', space=vmem, size = 0x2000, scoped, tag = 'input window, operand 0, single buffered']
    #allocation4 [shape = 's32[2]{0}', space=sflag, size = 0x8, scoped, tag = 'scoped memory for tpu_custom_call.1']
    #allocation5 [shape = 's32[2]{0}', space=sflag, size = 0x8, scoped, tag = 'scoped memory for tpu_custom_call.1']
    #allocation6 [shape = 'u8[196608]{0}', space=vmem, size = 0x30000, scoped, tag = 'input window, operand 1']
    #allocation7 [shape = 's32[2]{0}', space=sflag, size = 0x8, scoped, tag = 'scoped memory for tpu_custom_call.1']
    #allocation8 [shape = 'u8[196608]{0}', space=vmem, size = 0x30000, scoped, tag = 'input window, operand 2']
    #allocation9 [shape = 'u8[196608]{0}', space=vmem, size = 0x30000, scoped, tag = 'input window, operand 3']
    #allocation10 [shape = 's32[2]{0}', space=sflag, size = 0x8, scoped, tag = 'scoped memory for tpu_custom_call.1']
    #allocation11 [shape = 'u8[8192]{0}', space=vmem, size = 0x2000, scoped, tag = 'output window, operand 0, single buffered']
    %11 = vsyncpa [#allocation4], 0
    %12 = vsyncpa [#allocation7], 0
    %s13 = scalar_lea.sflag [#allocation7], 1
    %14 = vsyncpa %s13, 0
    %15 = vsyncpa [#allocation10], 0
    %s16 = scalar_lea.sflag [#allocation10], 1
    %17 = vsyncpa %s16, 0
    %18 = vsyncpa [#allocation5], 0
    loop: start=0, step=1, limit=4
    $region2: #{tpu_custom_call.1} parent=1 // loop_pre_header
      _
    $region3: #{tpu_custom_call.1} parent=1 // loop_header
      %s20 = sphi 0, %s24
      %p21 = scmp.ge.s32.totalorder %s20, 4
      %s27 = sphi 0, %s39
      %s28 = sphi 0, %s35
      %s29 = sphi 0, %s27
      %s30 = sphi 0, %s28
      %s31 = sphi 0, %s29
      %s32 = sphi 0, %s30
      %s42 = sphi 0, %s44
      %s45 = sphi 0, %s42
      %s46 = sphi 0, %s45
      %s62 = sphi 0, %s46
      %s68 = sphi 0, %s70
      %s71 = sphi 0, %s68
      %s72 = sphi 0, %s71
      %s88 = sphi 0, %s72
      %s94 = sphi 0, %s96
      %s97 = sphi 0, %s94
      %s98 = sphi 0, %s97
      %s114 = sphi 0, %s98
      %s120 = sphi 0, %s122
      %s123 = sphi 0, %s120
      %s124 = sphi 0, %s123
      %s140 = sphi 0, %s124
      %s144 = sphi 0, %s144
      %s146 = sphi 0, %s144
      %s147 = sphi 0, %s146
      %s161 = sphi 0, %s147
      %s165 = sphi 0, %s165
      %s167 = sphi 0, %s165
      %s168 = sphi 0, %s167
      %s182 = sphi 0, %s168
      %s188 = sphi 0, %s190
      %s191 = sphi 0, %s188
      %s192 = sphi 0, %s191
      %s208 = sphi 0, %s192
    $region4: #{tpu_custom_call.1} parent=1 // loop_header_branch
      %23 = sbr.rel (%p21) target = $region8
    $region5: #{tpu_custom_call.1} parent=1 // loop_body
      %s25 = ssub.s32 %s20, 1
      %s26 = ssub.s32 %s20, 2
      %s33 = sadd.s32 1, %s28
      %p34 = scmp.ge.s32.totalorder %s33, 2
      %s35 = scalar_select %p34, 0, %s33
      %s36 = sadd.s32 1, %s27
      %s37 = scalar_select %p34, %s36, %s27
      %p38 = scmp.ge.s32.totalorder %s37, 1
      %s39 = scalar_select %p38, 0, %s37
      %s40 = ssub.s32 %s27, %s39
      %p41 = scmp.eq.s32.totalorder %s40, 0
      %s43 = sadd.s32 %s42, 1
      %s44 = scalar_select %p41, %s42, %s43
      %p47 = pneg %p41
      %p48 = scmp.eq.s32.totalorder %s20, 1
      %p49 = por %p47, %p48
      %p50 = scmp.ne.s32.totalorder %s42, %s45
      %p51 = scmp.eq.s32.totalorder %s20, 0
      %p52 = por %p50, %p51
      %p53 = scmp.ne.s32.totalorder %s42, %s45
      %p54 = scmp.eq.s32.totalorder %s25, 1
      %p55 = por %p53, %p54
      %p56 = scmp.ne.s32.totalorder %s45, %s46
      %p57 = scmp.eq.s32.totalorder %s25, 0
      %p58 = por %p56, %p57
      %p59 = scmp.ne.s32.totalorder %s45, %s46
      %p60 = scmp.eq.s32.totalorder %s26, 1
      %p61 = por %p59, %p60
      %p63 = scmp.ne.s32.totalorder %s46, %s62
      %p64 = scmp.eq.s32.totalorder %s26, 0
      %p65 = por %p63, %p64
      %s66 = ssub.s32 %s28, %s35
      %p67 = scmp.eq.s32.totalorder %s66, 0
      %s69 = sadd.s32 %s68, 1
      %s70 = scalar_select %p67, %s68, %s69
      %p73 = pneg %p67
      %p74 = scmp.eq.s32.totalorder %s20, 1
      %p75 = por %p73, %p74
      %p76 = scmp.ne.s32.totalorder %s68, %s71
      %p77 = scmp.eq.s32.totalorder %s20, 0
      %p78 = por %p76, %p77
      %p79 = scmp.ne.s32.totalorder %s68, %s71
      %p80 = scmp.eq.s32.totalorder %s25, 1
      %p81 = por %p79, %p80
      %p82 = scmp.ne.s32.totalorder %s71, %s72
      %p83 = scmp.eq.s32.totalorder %s25, 0
      %p84 = por %p82, %p83
      %p85 = scmp.ne.s32.totalorder %s71, %s72
      %p86 = scmp.eq.s32.totalorder %s26, 1
      %p87 = por %p85, %p86
      %p89 = scmp.ne.s32.totalorder %s72, %s88
      %p90 = scmp.eq.s32.totalorder %s26, 0
      %p91 = por %p89, %p90
      %s92 = ssub.s32 %s28, %s35
      %p93 = scmp.eq.s32.totalorder %s92, 0
      %s95 = sadd.s32 %s94, 1
      %s96 = scalar_select %p93, %s94, %s95
      %p99 = pneg %p93
      %p100 = scmp.eq.s32.totalorder %s20, 1
      %p101 = por %p99, %p100
      %p102 = scmp.ne.s32.totalorder %s94, %s97
      %p103 = scmp.eq.s32.totalorder %s20, 0
      %p104 = por %p102, %p103
      %p105 = scmp.ne.s32.totalorder %s94, %s97
      %p106 = scmp.eq.s32.totalorder %s25, 1
      %p107 = por %p105, %p106
      %p108 = scmp.ne.s32.totalorder %s97, %s98
      %p109 = scmp.eq.s32.totalorder %s25, 0
      %p110 = por %p108, %p109
      %p111 = scmp.ne.s32.totalorder %s97, %s98
      %p112 = scmp.eq.s32.totalorder %s26, 1
      %p113 = por %p111, %p112
      %p115 = scmp.ne.s32.totalorder %s98, %s114
      %p116 = scmp.eq.s32.totalorder %s26, 0
      %p117 = por %p115, %p116
      %s118 = ssub.s32 %s28, %s35
      %p119 = scmp.eq.s32.totalorder %s118, 0
      %s121 = sadd.s32 %s120, 1
      %s122 = scalar_select %p119, %s120, %s121
      %p125 = pneg %p119
      %p126 = scmp.eq.s32.totalorder %s20, 1
      %p127 = por %p125, %p126
      %p128 = scmp.ne.s32.totalorder %s120, %s123
      %p129 = scmp.eq.s32.totalorder %s20, 0
      %p130 = por %p128, %p129
      %p131 = scmp.ne.s32.totalorder %s120, %s123
      %p132 = scmp.eq.s32.totalorder %s25, 1
      %p133 = por %p131, %p132
      %p134 = scmp.ne.s32.totalorder %s123, %s124
      %p135 = scmp.eq.s32.totalorder %s25, 0
      %p136 = por %p134, %p135
      %p137 = scmp.ne.s32.totalorder %s123, %s124
      %p138 = scmp.eq.s32.totalorder %s26, 1
      %p139 = por %p137, %p138
      %p141 = scmp.ne.s32.totalorder %s124, %s140
      %p142 = scmp.eq.s32.totalorder %s26, 0
      %p143 = por %p141, %p142
      %s145 = sadd.s32 %s144, 1
      %p148 = scmp.eq.s32.totalorder %s20, 1
      %p149 = scmp.ne.s32.totalorder %s144, %s146
      %p150 = scmp.eq.s32.totalorder %s20, 0
      %p151 = por %p149, %p150
      %p152 = scmp.ne.s32.totalorder %s144, %s146
      %p153 = scmp.eq.s32.totalorder %s25, 1
      %p154 = por %p152, %p153
      %p155 = scmp.ne.s32.totalorder %s146, %s147
      %p156 = scmp.eq.s32.totalorder %s25, 0
      %p157 = por %p155, %p156
      %p158 = scmp.ne.s32.totalorder %s146, %s147
      %p159 = scmp.eq.s32.totalorder %s26, 1
      %p160 = por %p158, %p159
      %p162 = scmp.ne.s32.totalorder %s147, %s161
      %p163 = scmp.eq.s32.totalorder %s26, 0
      %p164 = por %p162, %p163
      %s166 = sadd.s32 %s165, 1
      %p169 = scmp.eq.s32.totalorder %s20, 1
      %p170 = scmp.ne.s32.totalorder %s165, %s167
      %p171 = scmp.eq.s32.totalorder %s20, 0
      %p172 = por %p170, %p171
      %p173 = scmp.ne.s32.totalorder %s165, %s167
      %p174 = scmp.eq.s32.totalorder %s25, 1
      %p175 = por %p173, %p174
      %p176 = scmp.ne.s32.totalorder %s167, %s168
      %p177 = scmp.eq.s32.totalorder %s25, 0
      %p178 = por %p176, %p177
      %p179 = scmp.ne.s32.totalorder %s167, %s168
      %p180 = scmp.eq.s32.totalorder %s26, 1
      %p181 = por %p179, %p180
      %p183 = scmp.ne.s32.totalorder %s168, %s182
      %p184 = scmp.eq.s32.totalorder %s26, 0
      %p185 = por %p183, %p184
      %s186 = ssub.s32 %s27, %s39
      %p187 = scmp.eq.s32.totalorder %s186, 0
      %s189 = sadd.s32 %s188, 1
      %s190 = scalar_select %p187, %s188, %s189
      %p193 = pneg %p187
      %p194 = scmp.eq.s32.totalorder %s20, 1
      %p195 = por %p193, %p194
      %p196 = scmp.ne.s32.totalorder %s188, %s191
      %p197 = scmp.eq.s32.totalorder %s20, 0
      %p198 = por %p196, %p197
      %p199 = scmp.ne.s32.totalorder %s188, %s191
      %p200 = scmp.eq.s32.totalorder %s25, 1
      %p201 = por %p199, %p200
      %p202 = scmp.ne.s32.totalorder %s191, %s192
      %p203 = scmp.eq.s32.totalorder %s25, 0
      %p204 = por %p202, %p203
      %p205 = scmp.ne.s32.totalorder %s191, %s192
      %p206 = scmp.eq.s32.totalorder %s26, 1
      %p207 = por %p205, %p206
      %p209 = scmp.ne.s32.totalorder %s192, %s208
      %p210 = scmp.eq.s32.totalorder %s26, 0
      %p211 = por %p209, %p210
      %p212 = scmp.le.s32.totalorder 1, %s20
      %p213 = scmp.lt.s32.totalorder %s20, 3
      %p214 = pnand %p212, %p213
      %p215 = pneg %p214
      // Predicated region
      $region9: #{tpu_custom_call.1} parent=5 // pred_check
        _
      $region10: #{tpu_custom_call.1} parent=5 // pred_check_branch
        %217 = sbr.rel (%p214) target = $region12
      $region11: #{tpu_custom_call.1} parent=5 // pred_region
        %s218 = ssub.s32 %s20, 1
        // Predicated region
        $region13: #{tpu_custom_call.1} parent=11 // pred_check
          %p219 = pneg %p58
        $region14: #{tpu_custom_call.1} parent=11 // pred_check_branch
          %221 = sbr.rel (%p219) target = $region16
        $region15: #{tpu_custom_call.1} parent=11 // pred_region
          %s222 = smul.u32 2, %s29
          %s224 = ssub.s32 256, 256
          %225 = vsyncadd [#allocation4], %s224
          %s226 = smul.addr %s222, 128
          %s227 = scalar_lea.hbm %s0, %s226
          %s228 = sshll.u32 [#allocation3], 4
          %s229 = int_to_ptr.vmem [resolvable:$true] %s228
          %234 = dma.hbm_to_vmem [thread:$0]  %s227, 256, %s229, [#allocation4], 128, 128, 8
        $region16: #{tpu_custom_call.1} parent=11 // pred_fallthru
          _
        // Predicated region
        $region17: #{tpu_custom_call.1} parent=11 // pred_check
          %p235 = pneg %p157
        $region18: #{tpu_custom_call.1} parent=11 // pred_check_branch
          %237 = sbr.rel (%p235) target = $region20
        $region19: #{tpu_custom_call.1} parent=11 // pred_region
          _
        $region20: #{tpu_custom_call.1} parent=11 // pred_fallthru
          _
        // Predicated region
        $region21: #{tpu_custom_call.1} parent=11 // pred_check
          %p238 = pneg %p178
        $region22: #{tpu_custom_call.1} parent=11 // pred_check_branch
          %240 = sbr.rel (%p238) target = $region24
        $region23: #{tpu_custom_call.1} parent=11 // pred_region
          _
        $region24: #{tpu_custom_call.1} parent=11 // pred_fallthru
          _
      $region12: #{tpu_custom_call.1} parent=5 // pred_fallthru
        _
      %p241 = scmp.lt.s32.totalorder %s20, 2
      // Predicated region
      $region25: #{tpu_custom_call.1} parent=5 // pred_check
        %p242 = pneg %p241
      $region26: #{tpu_custom_call.1} parent=5 // pred_check_branch
        %244 = sbr.rel (%p242) target = $region28
      $region27: #{tpu_custom_call.1} parent=5 // pred_region
        // Predicated region
        $region29: #{tpu_custom_call.1} parent=27 // pred_check
          %p245 = pneg %p78
        $region30: #{tpu_custom_call.1} parent=27 // pred_check_branch
          %247 = sbr.rel (%p245) target = $region32
        $region31: #{tpu_custom_call.1} parent=27 // pred_region
          %s248 = sand.u32 %s20, 1
          %s249 = scalar_lea.sflag [#allocation7], %s248
          %s250 = sand.u32 %s68, 1
          %s251 = smul.addr %s250, 192
          %s252 = scalar_lea.vmem [#allocation6], %s251
          %s253 = smul.u32 3, %s28
          %s255 = ssub.s32 3072, 3072
          %256 = vsyncadd %s249, %s255
          %s257 = smul.addr %s253, 64
          %s258 = scalar_lea.hbm %s1, %s257
          %s259 = sshll.u32 %s252, 4
          %s260 = int_to_ptr.vmem [resolvable:$true] %s259
          %265 = dma.hbm_to_vmem [thread:$0]  %s258, 3072, %s260, %s249, 384, 192, 12
        $region32: #{tpu_custom_call.1} parent=27 // pred_fallthru
          _
        // Predicated region
        $region33: #{tpu_custom_call.1} parent=27 // pred_check
          %p266 = pneg %p104
        $region34: #{tpu_custom_call.1} parent=27 // pred_check_branch
          %268 = sbr.rel (%p266) target = $region36
        $region35: #{tpu_custom_call.1} parent=27 // pred_region
          %s269 = sand.u32 %s20, 1
          %s270 = scalar_lea.sflag [#allocation7], %s269
          %s271 = sand.u32 %s94, 1
          %s272 = smul.addr %s271, 192
          %s273 = scalar_lea.vmem [#allocation8], %s272
          %s274 = smul.u32 3, %s28
          %s276 = ssub.s32 3072, 3072
          %277 = vsyncadd %s270, %s276
          %s278 = smul.addr %s274, 64
          %s279 = scalar_lea.hbm %s2, %s278
          %s280 = sshll.u32 %s273, 4
          %s281 = int_to_ptr.vmem [resolvable:$true] %s280
          %286 = dma.hbm_to_vmem [thread:$0]  %s279, 3072, %s281, %s270, 384, 192, 12
        $region36: #{tpu_custom_call.1} parent=27 // pred_fallthru
          _
        // Predicated region
        $region37: #{tpu_custom_call.1} parent=27 // pred_check
          %p287 = pneg %p130
        $region38: #{tpu_custom_call.1} parent=27 // pred_check_branch
          %289 = sbr.rel (%p287) target = $region40
        $region39: #{tpu_custom_call.1} parent=27 // pred_region
          %s290 = sand.u32 %s120, 1
          %s291 = scalar_lea.sflag [#allocation10], %s290
          %s292 = sand.u32 %s120, 1
          %s293 = smul.addr %s292, 192
          %s294 = scalar_lea.vmem [#allocation9], %s293
          %s295 = smul.u32 48, %s28
          %s297 = ssub.s32 3072, 3072
          %298 = vsyncadd %s291, %s297
          %s299 = smul.addr %s295, 64
          %s300 = scalar_lea.hbm %s3, %s299
          %s301 = sshll.u32 %s294, 4
          %s302 = int_to_ptr.vmem [resolvable:$true] %s301
          %307 = dma.hbm_to_vmem [thread:$0]  %s300, 3072, %s302, %s291, 64, 64, 4
        $region40: #{tpu_custom_call.1} parent=27 // pred_fallthru
          _
      $region28: #{tpu_custom_call.1} parent=5 // pred_fallthru
        _
      %p308 = scmp.le.s32.totalorder 1, %s20
      %p309 = scmp.lt.s32.totalorder %s20, 3
      %p310 = pnand %p308, %p309
      %p311 = pneg %p310
      // Predicated region
      $region41: #{tpu_custom_call.1} parent=5 // pred_check
        _
      $region42: #{tpu_custom_call.1} parent=5 // pred_check_branch
        %313 = sbr.rel (%p310) target = $region44
      $region43: #{tpu_custom_call.1} parent=5 // pred_region
        %s314 = ssub.s32 %s20, 1
        // Predicated region
        $region45: #{tpu_custom_call.1} parent=43 // pred_check
          %p315 = pneg %p58
        $region46: #{tpu_custom_call.1} parent=43 // pred_check_branch
          %317 = sbr.rel (%p315) target = $region48
        $region47: #{tpu_custom_call.1} parent=43 // pred_region
          %318 = dma.done [#allocation4], 256
        $region48: #{tpu_custom_call.1} parent=43 // pred_fallthru
          _
        %s319 = sand.u32 %s25, 1
        %s320 = scalar_lea.sflag [#allocation7], %s319
        %s321 = sand.u32 %s71, 1
        %s322 = smul.addr %s321, 192
        %s323 = scalar_lea.vmem [#allocation6], %s322
        // Predicated region
        $region49: #{tpu_custom_call.1} parent=43 // pred_check
          %p324 = pneg %p84
        $region50: #{tpu_custom_call.1} parent=43 // pred_check_branch
          %326 = sbr.rel (%p324) target = $region52
        $region51: #{tpu_custom_call.1} parent=43 // pred_region
          %327 = dma.done %s320, 3072
        $region52: #{tpu_custom_call.1} parent=43 // pred_fallthru
          _
        %s328 = sand.u32 %s25, 1
        %s329 = scalar_lea.sflag [#allocation7], %s328
        %s330 = sand.u32 %s97, 1
        %s331 = smul.addr %s330, 192
        %s332 = scalar_lea.vmem [#allocation8], %s331
        // Predicated region
        $region53: #{tpu_custom_call.1} parent=43 // pred_check
          %p333 = pneg %p110
        $region54: #{tpu_custom_call.1} parent=43 // pred_check_branch
          %335 = sbr.rel (%p333) target = $region56
        $region55: #{tpu_custom_call.1} parent=43 // pred_region
          %336 = dma.done %s329, 3072
        $region56: #{tpu_custom_call.1} parent=43 // pred_fallthru
          _
        %s337 = sand.u32 %s123, 1
        %s338 = scalar_lea.sflag [#allocation10], %s337
        %s339 = sand.u32 %s123, 1
        %s340 = smul.addr %s339, 192
        %s341 = scalar_lea.vmem [#allocation9], %s340
        // Predicated region
        $region57: #{tpu_custom_call.1} parent=43 // pred_check
          %p342 = pneg %p136
        $region58: #{tpu_custom_call.1} parent=43 // pred_check_branch
          %344 = sbr.rel (%p342) target = $region60
        $region59: #{tpu_custom_call.1} parent=43 // pred_region
          %345 = dma.done %s338, 3072
        $region60: #{tpu_custom_call.1} parent=43 // pred_fallthru
          _
        %p346 = pneg %p58
        %p347 = pneg %p55
        %s348 = sand.u32 %s25, 1
        %s349 = scalar_lea.sflag [#allocation7], %s348
        %s350 = sand.u32 %s71, 1
        %s351 = smul.addr %s350, 192
        %s352 = scalar_lea.vmem [#allocation6], %s351
        %p353 = pneg %p84
        %p354 = pneg %p81
        %s355 = sand.u32 %s25, 1
        %s356 = scalar_lea.sflag [#allocation7], %s355
        %s357 = sand.u32 %s97, 1
        %s358 = smul.addr %s357, 192
        %s359 = scalar_lea.vmem [#allocation8], %s358
        %p360 = pneg %p110
        %p361 = pneg %p107
        %s362 = sand.u32 %s123, 1
        %s363 = scalar_lea.sflag [#allocation10], %s362
        %s364 = sand.u32 %s123, 1
        %s365 = smul.addr %s364, 192
        %s366 = scalar_lea.vmem [#allocation9], %s365
        %p367 = pneg %p136
        %p368 = pneg %p133
        %p369 = pneg %p157
        %p370 = pneg %p154
        %p371 = pneg %p178
        %p372 = pneg %p175
        %p373 = pneg %p204
        %p374 = pneg %p201
        %s375 = smul.u32 2, %s29
        %s376 = smul.u32 3, %s30
        %s377 = smul.u32 3, %s30
        %s378 = smul.u32 48, %s30
        %s379 = smul.u32 2, %s29
        %p381 = scmp.eq.s32.totalorder %s30, 0
        // Predicated region
        $region61: #{tpu_custom_call.1} parent=43 // pred_check
          %p382 = pneg %p381
        $region62: #{tpu_custom_call.1} parent=43 // pred_check_branch
          %384 = sbr.rel (%p382) target = $region64
        $region63: #{tpu_custom_call.1} parent=43 // pred_region
          %385 = vst [vmem:[#allocation2] sm:$0xff] 0.0
          %386 = vst [vmem:[#allocation2 + $0x8] sm:$0xff] 0.0
        $region64: #{tpu_custom_call.1} parent=43 // pred_fallthru
          _
        %v387 = vld [vmem:[#allocation3] sm:$0xff]
        %v388 = vld [vmem:[#allocation3 + $0x8] sm:$0xff]
        %v389 = vpack.c.bf16 %v388, %v387
        %v390 = vld [vmem:[%s323] sm:$0xff]
        %v391 = vld [vmem:[%s323 + $0x8] sm:$0xf]
        %v392 = vld [vmem:[%s323 + $0xc] sm:$0xff]
        %v393 = vld [vmem:[%s323 + $0x14] sm:$0xf]
        %v394 = vld [vmem:[%s323 + $0x18] sm:$0xff]
        %v395 = vld [vmem:[%s323 + $0x20] sm:$0xf]
        %v396 = vld [vmem:[%s323 + $0x24] sm:$0xff]
        %v397 = vld [vmem:[%s323 + $0x2c] sm:$0xf]
        %v398 = vld [vmem:[%s323 + $0x30] sm:$0xff]
        %v399 = vld [vmem:[%s323 + $0x38] sm:$0xf]
        %v400 = vld [vmem:[%s323 + $0x3c] sm:$0xff]
        %v401 = vld [vmem:[%s323 + $0x44] sm:$0xf]
        %v402 = vld [vmem:[%s323 + $0x48] sm:$0xff]
        %v403 = vld [vmem:[%s323 + $0x50] sm:$0xf]
        %v404 = vld [vmem:[%s323 + $0x54] sm:$0xff]
        %v405 = vld [vmem:[%s323 + $0x5c] sm:$0xf]
        %v406 = vld [vmem:[%s323 + $0x60] sm:$0xff]
        %v407 = vld [vmem:[%s323 + $0x68] sm:$0xf]
        %v408 = vld [vmem:[%s323 + $0x6c] sm:$0xff]
        %v409 = vld [vmem:[%s323 + $0x74] sm:$0xf]
        %v410 = vld [vmem:[%s323 + $0x78] sm:$0xff]
        %v411 = vld [vmem:[%s323 + $0x80] sm:$0xf]
        %v412 = vld [vmem:[%s323 + $0x84] sm:$0xff]
        %v413 = vld [vmem:[%s323 + $0x8c] sm:$0xf]
        %v414 = vld [vmem:[%s323 + $0x90] sm:$0xff]
        %v415 = vld [vmem:[%s323 + $0x98] sm:$0xf]
        %v416 = vld [vmem:[%s323 + $0x9c] sm:$0xff]
        %v417 = vld [vmem:[%s323 + $0xa4] sm:$0xf]
        %v418 = vld [vmem:[%s323 + $0xa8] sm:$0xff]
        %v419 = vld [vmem:[%s323 + $0xb0] sm:$0xf]
        %v420 = vld [vmem:[%s323 + $0xb4] sm:$0xff]
        %v421 = vld [vmem:[%s323 + $0xbc] sm:$0xf]
        %v454 = vunpack.c.l.b16 %v390
        %v455 = vunpack.c.h.b16 %v390
        %v456 = vunpack.c.l.b16 %v391
        %v457 = vunpack.c.l.b16 %v392
        %v458 = vunpack.c.h.b16 %v392
        %v459 = vunpack.c.l.b16 %v393
        %v460 = vunpack.c.l.b16 %v394
        %v461 = vunpack.c.h.b16 %v394
        %v462 = vunpack.c.l.b16 %v395
        %v463 = vunpack.c.l.b16 %v396
        %v464 = vunpack.c.h.b16 %v396
        %v465 = vunpack.c.l.b16 %v397
        %v466 = vunpack.c.l.b16 %v398
        %v467 = vunpack.c.h.b16 %v398
        %v468 = vunpack.c.l.b16 %v399
        %v469 = vunpack.c.l.b16 %v400
        %v470 = vunpack.c.h.b16 %v400
        %v471 = vunpack.c.l.b16 %v401
        %v472 = vunpack.c.l.b16 %v402
        %v473 = vunpack.c.h.b16 %v402
        %v474 = vunpack.c.l.b16 %v403
        %v475 = vunpack.c.l.b16 %v404
        %v476 = vunpack.c.h.b16 %v404
        %v477 = vunpack.c.l.b16 %v405
        %v478 = vunpack.c.l.b16 %v406
        %v479 = vunpack.c.h.b16 %v406
        %v480 = vunpack.c.l.b16 %v407
        %v481 = vunpack.c.l.b16 %v408
        %v482 = vunpack.c.h.b16 %v408
        %v483 = vunpack.c.l.b16 %v409
        %v484 = vunpack.c.l.b16 %v410
        %v485 = vunpack.c.h.b16 %v410
        %v486 = vunpack.c.l.b16 %v411
        %v487 = vunpack.c.l.b16 %v412
        %v488 = vunpack.c.h.b16 %v412
        %v489 = vunpack.c.l.b16 %v413
        %v490 = vunpack.c.l.b16 %v414
        %v491 = vunpack.c.h.b16 %v414
        %v492 = vunpack.c.l.b16 %v415
        %v493 = vunpack.c.l.b16 %v416
        %v494 = vunpack.c.h.b16 %v416
        %v495 = vunpack.c.l.b16 %v417
        %v496 = vunpack.c.l.b16 %v418
        %v497 = vunpack.c.h.b16 %v418
        %v498 = vunpack.c.l.b16 %v419
        %v499 = vunpack.c.l.b16 %v420
        %v500 = vunpack.c.h.b16 %v420
        %v501 = vunpack.c.l.b16 %v421
        %v502 = vpack.c.b16 %v457, %v454
        %v503 = vpack.c.b16 %v458, %v455
        %v504 = vpack.c.b16 %v459, %v456
        %v505 = vpack.c.b16 %v463, %v460
        %v506 = vpack.c.b16 %v464, %v461
        %v507 = vpack.c.b16 %v465, %v462
        %v508 = vpack.c.b16 %v469, %v466
        %v509 = vpack.c.b16 %v470, %v467
        %v510 = vpack.c.b16 %v471, %v468
        %v511 = vpack.c.b16 %v475, %v472
        %v512 = vpack.c.b16 %v476, %v473
        %v513 = vpack.c.b16 %v477, %v474
        %v514 = vpack.c.b16 %v481, %v478
        %v515 = vpack.c.b16 %v482, %v479
        %v516 = vpack.c.b16 %v483, %v480
        %v517 = vpack.c.b16 %v487, %v484
        %v518 = vpack.c.b16 %v488, %v485
        %v519 = vpack.c.b16 %v489, %v486
        %v520 = vpack.c.b16 %v493, %v490
        %v521 = vpack.c.b16 %v494, %v491
        %v522 = vpack.c.b16 %v495, %v492
        %v523 = vpack.c.b16 %v499, %v496
        %v524 = vpack.c.b16 %v500, %v497
        %v525 = vpack.c.b16 %v501, %v498
        %550 = vmatprep.subr.bf16.mxu0 %v503
        %551 = vmatpush1.bf16.msra.mxu0 %v502
        %552 = vmatprep.subr.bf16.mxu0 %v506
        %553 = vmatpush1.bf16.msra.mxu0 %v505
        %554 = vmatprep.subr.bf16.mxu0 %v509
        %555 = vmatpush1.bf16.msra.mxu0 %v508
        %556 = vmatprep.subr.bf16.mxu0 %v512
        %557 = vmatpush1.bf16.msra.mxu0 %v511
        %558 = vmatprep.subr.bf16.mxu0 %v515
        %559 = vmatpush1.bf16.msra.mxu0 %v514
        %560 = vmatprep.subr.bf16.mxu0 %v518
        %561 = vmatpush1.bf16.msra.mxu0 %v517
        %562 = vmatprep.subr.bf16.mxu0 %v521
        %563 = vmatpush1.bf16.msra.mxu0 %v520
        %564 = vmatprep.subr.bf16.mxu0 %v524
        %565 = vmatpush1.bf16.msra.mxu0 %v523
        %566 = vmatprep.subr.bf16.mxu0 0
        %567 = vmatpush1.bf16.msra.mxu0 0
        %568 = vmatprep.subr.bf16.mxu0 0
        %569 = vmatpush1.bf16.msra.mxu0 0
        %570 = vmatprep.subr.bf16.mxu0 0
        %571 = vmatpush1.bf16.msra.mxu0 0
        %572 = vmatprep.subr.bf16.mxu0 0
        %573 = vmatpush1.bf16.msra.mxu0 0
        %574 = vmatprep.subr.bf16.mxu0 0
        %575 = vmatpush1.bf16.msra.mxu0 0
        %576 = vmatprep.subr.bf16.mxu0 0
        %577 = vmatpush1.bf16.msra.mxu0 0
        %578 = vmatprep.subr.bf16.mxu0 0
        %579 = vmatpush1.bf16.msra.mxu0 0
        %580 = vmatprep.subr.bf16.mxu0 0
        %581 = vmatpush1.bf16.msra.mxu0 0
        %582 = vmatprep.mubr.bf16.mxu0 0
        %583 = vmatmul.mubr.bf16.gmra.mrb[0].mxu0 %v389
        %v584 = vpop.f32.mrb[0].mxu0
        %v585 = vadd.f32 0.0, %v584
        %v586 = vpop.f32.mrb[0].mxu0
        %v587 = vadd.f32 0.0, %v586
        %v588 = vpop.f32.mrb[0].mxu0
        %v589 = vadd.f32 0.0, %v588
        %v590 = vpop.f32.mrb[0].mxu0
        %v591 = vadd.f32 0.0, %v590
        %592 = vdwg.mxu0
        %593 = vmatprep.subr.bf16.mxu0 0
        %594 = vmatpush1.bf16.msra.mxu0 %v504
        %595 = vmatprep.subr.bf16.mxu0 0
        %596 = vmatpush1.bf16.msra.mxu0 %v507
        %597 = vmatprep.subr.bf16.mxu0 0
        %598 = vmatpush1.bf16.msra.mxu0 %v510
        %599 = vmatprep.subr.bf16.mxu0 0
        %600 = vmatpush1.bf16.msra.mxu0 %v513
        %601 = vmatprep.subr.bf16.mxu0 0
        %602 = vmatpush1.bf16.msra.mxu0 %v516
        %603 = vmatprep.subr.bf16.mxu0 0
        %604 = vmatpush1.bf16.msra.mxu0 %v519
        %605 = vmatprep.subr.bf16.mxu0 0
        %606 = vmatpush1.bf16.msra.mxu0 %v522
        %607 = vmatprep.subr.bf16.mxu0 0
        %608 = vmatpush1.bf16.msra.mxu0 %v525
        %609 = vmatprep.subr.bf16.mxu0 0
        %610 = vmatpush1.bf16.msra.mxu0 0
        %611 = vmatprep.subr.bf16.mxu0 0
        %612 = vmatpush1.bf16.msra.mxu0 0
        %613 = vmatprep.subr.bf16.mxu0 0
        %614 = vmatpush1.bf16.msra.mxu0 0
        %615 = vmatprep.subr.bf16.mxu0 0
        %616 = vmatpush1.bf16.msra.mxu0 0
        %617 = vmatprep.subr.bf16.mxu0 0
        %618 = vmatpush1.bf16.msra.mxu0 0
        %619 = vmatprep.subr.bf16.mxu0 0
        %620 = vmatpush1.bf16.msra.mxu0 0
        %621 = vmatprep.subr.bf16.mxu0 0
        %622 = vmatpush1.bf16.msra.mxu0 0
        %623 = vmatprep.subr.bf16.mxu0 0
        %624 = vmatpush1.bf16.msra.mxu0 0
        %625 = vmatprep.mubr.bf16.mxu0 0
        %626 = vmatmul.mubr.bf16.gmra.mrb[0].mxu0 %v389
        %v627 = vpop.f32.mrb[0].mxu0
        %v628 = vadd.f32 0.0, %v627
        %v629 = vpop.f32.mrb[0].mxu0
        %v630 = vpop.f32.mrb[0].mxu0
        %v631 = vadd.f32 0.0, %v630
        %v632 = vpop.f32.mrb[0].mxu0
        %633 = vdwg.mxu0
        %v634 = vld [vmem:[%s332] sm:$0xff]
        %v635 = vld [vmem:[%s332 + $0x8] sm:$0xf]
        %v636 = vld [vmem:[%s332 + $0xc] sm:$0xff]
        %v637 = vld [vmem:[%s332 + $0x14] sm:$0xf]
        %v638 = vld [vmem:[%s332 + $0x18] sm:$0xff]
        %v639 = vld [vmem:[%s332 + $0x20] sm:$0xf]
        %v640 = vld [vmem:[%s332 + $0x24] sm:$0xff]
        %v641 = vld [vmem:[%s332 + $0x2c] sm:$0xf]
        %v642 = vld [vmem:[%s332 + $0x30] sm:$0xff]
        %v643 = vld [vmem:[%s332 + $0x38] sm:$0xf]
        %v644 = vld [vmem:[%s332 + $0x3c] sm:$0xff]
        %v645 = vld [vmem:[%s332 + $0x44] sm:$0xf]
        %v646 = vld [vmem:[%s332 + $0x48] sm:$0xff]
        %v647 = vld [vmem:[%s332 + $0x50] sm:$0xf]
        %v648 = vld [vmem:[%s332 + $0x54] sm:$0xff]
        %v649 = vld [vmem:[%s332 + $0x5c] sm:$0xf]
        %v650 = vld [vmem:[%s332 + $0x60] sm:$0xff]
        %v651 = vld [vmem:[%s332 + $0x68] sm:$0xf]
        %v652 = vld [vmem:[%s332 + $0x6c] sm:$0xff]
        %v653 = vld [vmem:[%s332 + $0x74] sm:$0xf]
        %v654 = vld [vmem:[%s332 + $0x78] sm:$0xff]
        %v655 = vld [vmem:[%s332 + $0x80] sm:$0xf]
        %v656 = vld [vmem:[%s332 + $0x84] sm:$0xff]
        %v657 = vld [vmem:[%s332 + $0x8c] sm:$0xf]
        %v658 = vld [vmem:[%s332 + $0x90] sm:$0xff]
        %v659 = vld [vmem:[%s332 + $0x98] sm:$0xf]
        %v660 = vld [vmem:[%s332 + $0x9c] sm:$0xff]
        %v661 = vld [vmem:[%s332 + $0xa4] sm:$0xf]
        %v662 = vld [vmem:[%s332 + $0xa8] sm:$0xff]
        %v663 = vld [vmem:[%s332 + $0xb0] sm:$0xf]
        %v664 = vld [vmem:[%s332 + $0xb4] sm:$0xff]
        %v665 = vld [vmem:[%s332 + $0xbc] sm:$0xf]
        %v698 = vunpack.c.l.b16 %v634
        %v699 = vunpack.c.h.b16 %v634
        %v700 = vunpack.c.l.b16 %v635
        %v701 = vunpack.c.l.b16 %v636
        %v702 = vunpack.c.h.b16 %v636
        %v703 = vunpack.c.l.b16 %v637
        %v704 = vunpack.c.l.b16 %v638
        %v705 = vunpack.c.h.b16 %v638
        %v706 = vunpack.c.l.b16 %v639
        %v707 = vunpack.c.l.b16 %v640
        %v708 = vunpack.c.h.b16 %v640
        %v709 = vunpack.c.l.b16 %v641
        %v710 = vunpack.c.l.b16 %v642
        %v711 = vunpack.c.h.b16 %v642
        %v712 = vunpack.c.l.b16 %v643
        %v713 = vunpack.c.l.b16 %v644
        %v714 = vunpack.c.h.b16 %v644
        %v715 = vunpack.c.l.b16 %v645
        %v716 = vunpack.c.l.b16 %v646
        %v717 = vunpack.c.h.b16 %v646
        %v718 = vunpack.c.l.b16 %v647
        %v719 = vunpack.c.l.b16 %v648
        %v720 = vunpack.c.h.b16 %v648
        %v721 = vunpack.c.l.b16 %v649
        %v722 = vunpack.c.l.b16 %v650
        %v723 = vunpack.c.h.b16 %v650
        %v724 = vunpack.c.l.b16 %v651
        %v725 = vunpack.c.l.b16 %v652
        %v726 = vunpack.c.h.b16 %v652
        %v727 = vunpack.c.l.b16 %v653
        %v728 = vunpack.c.l.b16 %v654
        %v729 = vunpack.c.h.b16 %v654
        %v730 = vunpack.c.l.b16 %v655
        %v731 = vunpack.c.l.b16 %v656
        %v732 = vunpack.c.h.b16 %v656
        %v733 = vunpack.c.l.b16 %v657
        %v734 = vunpack.c.l.b16 %v658
        %v735 = vunpack.c.h.b16 %v658
        %v736 = vunpack.c.l.b16 %v659
        %v737 = vunpack.c.l.b16 %v660
        %v738 = vunpack.c.h.b16 %v660
        %v739 = vunpack.c.l.b16 %v661
        %v740 = vunpack.c.l.b16 %v662
        %v741 = vunpack.c.h.b16 %v662
        %v742 = vunpack.c.l.b16 %v663
        %v743 = vunpack.c.l.b16 %v664
        %v744 = vunpack.c.h.b16 %v664
        %v745 = vunpack.c.l.b16 %v665
        %v746 = vpack.c.b16 %v701, %v698
        %v747 = vpack.c.b16 %v702, %v699
        %v748 = vpack.c.b16 %v703, %v700
        %v749 = vpack.c.b16 %v707, %v704
        %v750 = vpack.c.b16 %v708, %v705
        %v751 = vpack.c.b16 %v709, %v706
        %v752 = vpack.c.b16 %v713, %v710
        %v753 = vpack.c.b16 %v714, %v711
        %v754 = vpack.c.b16 %v715, %v712
        %v755 = vpack.c.b16 %v719, %v716
        %v756 = vpack.c.b16 %v720, %v717
        %v757 = vpack.c.b16 %v721, %v718
        %v758 = vpack.c.b16 %v725, %v722
        %v759 = vpack.c.b16 %v726, %v723
        %v760 = vpack.c.b16 %v727, %v724
        %v761 = vpack.c.b16 %v731, %v728
        %v762 = vpack.c.b16 %v732, %v729
        %v763 = vpack.c.b16 %v733, %v730
        %v764 = vpack.c.b16 %v737, %v734
        %v765 = vpack.c.b16 %v738, %v735
        %v766 = vpack.c.b16 %v739, %v736
        %v767 = vpack.c.b16 %v743, %v740
        %v768 = vpack.c.b16 %v744, %v741
        %v769 = vpack.c.b16 %v745, %v742
        %794 = vmatprep.subr.bf16.mxu0 %v747
        %795 = vmatpush1.bf16.msra.mxu0 %v746
        %796 = vmatprep.subr.bf16.mxu0 %v750
        %797 = vmatpush1.bf16.msra.mxu0 %v749
        %798 = vmatprep.subr.bf16.mxu0 %v753
        %799 = vmatpush1.bf16.msra.mxu0 %v752
        %800 = vmatprep.subr.bf16.mxu0 %v756
        %801 = vmatpush1.bf16.msra.mxu0 %v755
        %802 = vmatprep.subr.bf16.mxu0 %v759
        %803 = vmatpush1.bf16.msra.mxu0 %v758
        %804 = vmatprep.subr.bf16.mxu0 %v762
        %805 = vmatpush1.bf16.msra.mxu0 %v761
        %806 = vmatprep.subr.bf16.mxu0 %v765
        %807 = vmatpush1.bf16.msra.mxu0 %v764
        %808 = vmatprep.subr.bf16.mxu0 %v768
        %809 = vmatpush1.bf16.msra.mxu0 %v767
        %810 = vmatprep.subr.bf16.mxu0 0
        %811 = vmatpush1.bf16.msra.mxu0 0
        %812 = vmatprep.subr.bf16.mxu0 0
        %813 = vmatpush1.bf16.msra.mxu0 0
        %814 = vmatprep.subr.bf16.mxu0 0
        %815 = vmatpush1.bf16.msra.mxu0 0
        %816 = vmatprep.subr.bf16.mxu0 0
        %817 = vmatpush1.bf16.msra.mxu0 0
        %818 = vmatprep.subr.bf16.mxu0 0
        %819 = vmatpush1.bf16.msra.mxu0 0
        %820 = vmatprep.subr.bf16.mxu0 0
        %821 = vmatpush1.bf16.msra.mxu0 0
        %822 = vmatprep.subr.bf16.mxu0 0
        %823 = vmatpush1.bf16.msra.mxu0 0
        %824 = vmatprep.subr.bf16.mxu0 0
        %825 = vmatpush1.bf16.msra.mxu0 0
        %826 = vmatprep.mubr.bf16.mxu0 0
        %827 = vmatmul.mubr.bf16.gmra.mrb[0].mxu0 %v389
        %v828 = vpop.f32.mrb[0].mxu0
        %v829 = vadd.f32 0.0, %v828
        %v830 = vpop.f32.mrb[0].mxu0
        %v831 = vadd.f32 0.0, %v830
        %v832 = vpop.f32.mrb[0].mxu0
        %v833 = vadd.f32 0.0, %v832
        %v834 = vpop.f32.mrb[0].mxu0
        %v835 = vadd.f32 0.0, %v834
        %836 = vdwg.mxu0
        %837 = vmatprep.subr.bf16.mxu0 0
        %838 = vmatpush1.bf16.msra.mxu0 %v748
        %839 = vmatprep.subr.bf16.mxu0 0
        %840 = vmatpush1.bf16.msra.mxu0 %v751
        %841 = vmatprep.subr.bf16.mxu0 0
        %842 = vmatpush1.bf16.msra.mxu0 %v754
        %843 = vmatprep.subr.bf16.mxu0 0
        %844 = vmatpush1.bf16.msra.mxu0 %v757
        %845 = vmatprep.subr.bf16.mxu0 0
        %846 = vmatpush1.bf16.msra.mxu0 %v760
        %847 = vmatprep.subr.bf16.mxu0 0
        %848 = vmatpush1.bf16.msra.mxu0 %v763
        %849 = vmatprep.subr.bf16.mxu0 0
        %850 = vmatpush1.bf16.msra.mxu0 %v766
        %851 = vmatprep.subr.bf16.mxu0 0
        %852 = vmatpush1.bf16.msra.mxu0 %v769
        %853 = vmatprep.subr.bf16.mxu0 0
        %854 = vmatpush1.bf16.msra.mxu0 0
        %855 = vmatprep.subr.bf16.mxu0 0
        %856 = vmatpush1.bf16.msra.mxu0 0
        %857 = vmatprep.subr.bf16.mxu0 0
        %858 = vmatpush1.bf16.msra.mxu0 0
        %859 = vmatprep.subr.bf16.mxu0 0
        %860 = vmatpush1.bf16.msra.mxu0 0
        %861 = vmatprep.subr.bf16.mxu0 0
        %862 = vmatpush1.bf16.msra.mxu0 0
        %863 = vmatprep.subr.bf16.mxu0 0
        %864 = vmatpush1.bf16.msra.mxu0 0
        %865 = vmatprep.subr.bf16.mxu0 0
        %866 = vmatpush1.bf16.msra.mxu0 0
        %867 = vmatprep.subr.bf16.mxu0 0
        %868 = vmatpush1.bf16.msra.mxu0 0
        %869 = vmatprep.mubr.bf16.mxu0 0
        %870 = vmatmul.mubr.bf16.gmra.mrb[0].mxu0 %v389
        %v871 = vpop.f32.mrb[0].mxu0
        %v872 = vadd.f32 0.0, %v871
        %v873 = vpop.f32.mrb[0].mxu0
        %v874 = vpop.f32.mrb[0].mxu0
        %v875 = vadd.f32 0.0, %v874
        %v876 = vpop.f32.mrb[0].mxu0
        %877 = vdwg.mxu0
        %v878 = vxor.u32 %v829, 2147483648
        %v879 = vxor.u32 %v831, 2147483648
        %v880 = vxor.u32 %v872, 2147483648
        %v881 = vxor.u32 %v833, 2147483648
        %v882 = vxor.u32 %v835, 2147483648
        %v883 = vxor.u32 %v875, 2147483648
        %v884 = vmul.f32 %v878, 1.442695
        %v885 = vpow.pop %v884
        %v886 = vmul.f32 %v879, 1.442695
        %v887 = vpow.pop %v886
        %v888 = vmul.f32 %v880, 1.442695
        %v889 = vpow.pop %v888
        %v890 = vmul.f32 %v881, 1.442695
        %v891 = vpow.pop %v890
        %v892 = vmul.f32 %v882, 1.442695
        %v893 = vpow.pop %v892
        %v894 = vmul.f32 %v883, 1.442695
        %v895 = vpow.pop %v894
        %v896 = vadd.f32 %v885, 1.0
        %v897 = vadd.f32 %v887, 1.0
        %v898 = vadd.f32 %v889, 1.0
        %v899 = vadd.f32 %v891, 1.0
        %v900 = vadd.f32 %v893, 1.0
        %v901 = vadd.f32 %v895, 1.0
        %v902 = vrcp.pop %v896
        %v903 = vmul.f32 1.0, %v902
        %v904 = vrcp.pop %v897
        %v905 = vmul.f32 1.0, %v904
        %v906 = vrcp.pop %v898
        %v907 = vmul.f32 1.0, %v906
        %v908 = vrcp.pop %v899
        %v909 = vmul.f32 1.0, %v908
        %v910 = vrcp.pop %v900
        %v911 = vmul.f32 1.0, %v910
        %v912 = vrcp.pop %v901
        %v913 = vmul.f32 1.0, %v912
        %v914 = vmul.f32 %v829, %v903
        %v915 = vmul.f32 %v831, %v905
        %v916 = vmul.f32 %v872, %v907
        %v917 = vmul.f32 %v833, %v909
        %v918 = vmul.f32 %v835, %v911
        %v919 = vmul.f32 %v875, %v913
        %v920 = vmul.f32 %v914, %v585
        %v921 = vmul.f32 %v915, %v587
        %v922 = vmul.f32 %v916, %v628
        %v923 = vmul.f32 %v917, %v589
        %v924 = vmul.f32 %v918, %v591
        %v925 = vmul.f32 %v919, %v631
        %v926 = vld [vmem:[#allocation2] sm:$0xff]
        %v927 = vld [vmem:[#allocation2 + $0x8] sm:$0xff]
        %v928 = vpack.c.bf16 %v923, %v920
        %v929 = vpack.c.bf16 %v924, %v921
        %v930 = vpack.c.bf16 %v925, %v922
        %v931 = vld [vmem:[%s341] sm:$0xf]
        %v932 = vld [vmem:[%s341 + $0x4] sm:$0xf]
        %v933 = vld [vmem:[%s341 + $0x8] sm:$0xf]
        %v934 = vld [vmem:[%s341 + $0xc] sm:$0xf]
        %v935 = vld [vmem:[%s341 + $0x10] sm:$0xf]
        %v936 = vld [vmem:[%s341 + $0x14] sm:$0xf]
        %v937 = vld [vmem:[%s341 + $0x18] sm:$0xf]
        %v938 = vld [vmem:[%s341 + $0x1c] sm:$0xf]
        %v939 = vld [vmem:[%s341 + $0x20] sm:$0xf]
        %v940 = vld [vmem:[%s341 + $0x24] sm:$0xf]
        %v941 = vld [vmem:[%s341 + $0x28] sm:$0xf]
        %v942 = vld [vmem:[%s341 + $0x2c] sm:$0xf]
        %v943 = vld [vmem:[%s341 + $0x30] sm:$0xf]
        %v944 = vld [vmem:[%s341 + $0x34] sm:$0xf]
        %v945 = vld [vmem:[%s341 + $0x38] sm:$0xf]
        %v946 = vld [vmem:[%s341 + $0x3c] sm:$0xf]
        %v947 = vld [vmem:[%s341 + $0x40] sm:$0xf]
        %v948 = vld [vmem:[%s341 + $0x44] sm:$0xf]
        %v949 = vld [vmem:[%s341 + $0x48] sm:$0xf]
        %v950 = vld [vmem:[%s341 + $0x4c] sm:$0xf]
        %v951 = vld [vmem:[%s341 + $0x50] sm:$0xf]
        %v952 = vld [vmem:[%s341 + $0x54] sm:$0xf]
        %v953 = vld [vmem:[%s341 + $0x58] sm:$0xf]
        %v954 = vld [vmem:[%s341 + $0x5c] sm:$0xf]
        %v955 = vld [vmem:[%s341 + $0x60] sm:$0xf]
        %v956 = vld [vmem:[%s341 + $0x64] sm:$0xf]
        %v957 = vld [vmem:[%s341 + $0x68] sm:$0xf]
        %v958 = vld [vmem:[%s341 + $0x6c] sm:$0xf]
        %v959 = vld [vmem:[%s341 + $0x70] sm:$0xf]
        %v960 = vld [vmem:[%s341 + $0x74] sm:$0xf]
        %v961 = vld [vmem:[%s341 + $0x78] sm:$0xf]
        %v962 = vld [vmem:[%s341 + $0x7c] sm:$0xf]
        %v963 = vld [vmem:[%s341 + $0x80] sm:$0xf]
        %v964 = vld [vmem:[%s341 + $0x84] sm:$0xf]
        %v965 = vld [vmem:[%s341 + $0x88] sm:$0xf]
        %v966 = vld [vmem:[%s341 + $0x8c] sm:$0xf]
        %v967 = vld [vmem:[%s341 + $0x90] sm:$0xf]
        %v968 = vld [vmem:[%s341 + $0x94] sm:$0xf]
        %v969 = vld [vmem:[%s341 + $0x98] sm:$0xf]
        %v970 = vld [vmem:[%s341 + $0x9c] sm:$0xf]
        %v971 = vld [vmem:[%s341 + $0xa0] sm:$0xf]
        %v972 = vld [vmem:[%s341 + $0xa4] sm:$0xf]
        %v973 = vld [vmem:[%s341 + $0xa8] sm:$0xf]
        %v974 = vld [vmem:[%s341 + $0xac] sm:$0xf]
        %v975 = vld [vmem:[%s341 + $0xb0] sm:$0xf]
        %v976 = vld [vmem:[%s341 + $0xb4] sm:$0xf]
        %v977 = vld [vmem:[%s341 + $0xb8] sm:$0xf]
        %v978 = vld [vmem:[%s341 + $0xbc] sm:$0xf]
        %v1027 = vunpack.c.l.b16 %v931
        %v1028 = vunpack.c.l.b16 %v932
        %v1029 = vunpack.c.l.b16 %v933
        %v1030 = vunpack.c.l.b16 %v934
        %v1031 = vunpack.c.l.b16 %v935
        %v1032 = vunpack.c.l.b16 %v936
        %v1033 = vunpack.c.l.b16 %v937
        %v1034 = vunpack.c.l.b16 %v938
        %v1035 = vunpack.c.l.b16 %v939
        %v1036 = vunpack.c.l.b16 %v940
        %v1037 = vunpack.c.l.b16 %v941
        %v1038 = vunpack.c.l.b16 %v942
        %v1039 = vunpack.c.l.b16 %v943
        %v1040 = vunpack.c.l.b16 %v944
        %v1041 = vunpack.c.l.b16 %v945
        %v1042 = vunpack.c.l.b16 %v946
        %v1043 = vunpack.c.l.b16 %v947
        %v1044 = vunpack.c.l.b16 %v948
        %v1045 = vunpack.c.l.b16 %v949
        %v1046 = vunpack.c.l.b16 %v950
        %v1047 = vunpack.c.l.b16 %v951
        %v1048 = vunpack.c.l.b16 %v952
        %v1049 = vunpack.c.l.b16 %v953
        %v1050 = vunpack.c.l.b16 %v954
        %v1051 = vunpack.c.l.b16 %v955
        %v1052 = vunpack.c.l.b16 %v956
        %v1053 = vunpack.c.l.b16 %v957
        %v1054 = vunpack.c.l.b16 %v958
        %v1055 = vunpack.c.l.b16 %v959
        %v1056 = vunpack.c.l.b16 %v960
        %v1057 = vunpack.c.l.b16 %v961
        %v1058 = vunpack.c.l.b16 %v962
        %v1059 = vunpack.c.l.b16 %v963
        %v1060 = vunpack.c.l.b16 %v964
        %v1061 = vunpack.c.l.b16 %v965
        %v1062 = vunpack.c.l.b16 %v966
        %v1063 = vunpack.c.l.b16 %v967
        %v1064 = vunpack.c.l.b16 %v968
        %v1065 = vunpack.c.l.b16 %v969
        %v1066 = vunpack.c.l.b16 %v970
        %v1067 = vunpack.c.l.b16 %v971
        %v1068 = vunpack.c.l.b16 %v972
        %v1069 = vunpack.c.l.b16 %v973
        %v1070 = vunpack.c.l.b16 %v974
        %v1071 = vunpack.c.l.b16 %v975
        %v1072 = vunpack.c.l.b16 %v976
        %v1073 = vunpack.c.l.b16 %v977
        %v1074 = vunpack.c.l.b16 %v978
        %v1075 = vpack.c.b16 %v1028, %v1027
        %v1076 = vpack.c.b16 %v1030, %v1029
        %v1077 = vpack.c.b16 %v1032, %v1031
        %v1078 = vpack.c.b16 %v1034, %v1033
        %v1079 = vpack.c.b16 %v1036, %v1035
        %v1080 = vpack.c.b16 %v1038, %v1037
        %v1081 = vpack.c.b16 %v1040, %v1039
        %v1082 = vpack.c.b16 %v1042, %v1041
        %v1083 = vpack.c.b16 %v1044, %v1043
        %v1084 = vpack.c.b16 %v1046, %v1045
        %v1085 = vpack.c.b16 %v1048, %v1047
        %v1086 = vpack.c.b16 %v1050, %v1049
        %v1087 = vpack.c.b16 %v1052, %v1051
        %v1088 = vpack.c.b16 %v1054, %v1053
        %v1089 = vpack.c.b16 %v1056, %v1055
        %v1090 = vpack.c.b16 %v1058, %v1057
        %v1091 = vpack.c.b16 %v1060, %v1059
        %v1092 = vpack.c.b16 %v1062, %v1061
        %v1093 = vpack.c.b16 %v1064, %v1063
        %v1094 = vpack.c.b16 %v1066, %v1065
        %v1095 = vpack.c.b16 %v1068, %v1067
        %v1096 = vpack.c.b16 %v1070, %v1069
        %v1097 = vpack.c.b16 %v1072, %v1071
        %v1098 = vpack.c.b16 %v1074, %v1073
        %1123 = vmatprep.subr.bf16.mxu0 0
        %1124 = vmatpush1.bf16.msra.mxu0 %v1075
        %1125 = vmatprep.subr.bf16.mxu0 0
        %1126 = vmatpush1.bf16.msra.mxu0 %v1076
        %1127 = vmatprep.subr.bf16.mxu0 0
        %1128 = vmatpush1.bf16.msra.mxu0 %v1077
        %1129 = vmatprep.subr.bf16.mxu0 0
        %1130 = vmatpush1.bf16.msra.mxu0 %v1078
        %1131 = vmatprep.subr.bf16.mxu0 0
        %1132 = vmatpush1.bf16.msra.mxu0 %v1079
        %1133 = vmatprep.subr.bf16.mxu0 0
        %1134 = vmatpush1.bf16.msra.mxu0 %v1080
        %1135 = vmatprep.subr.bf16.mxu0 0
        %1136 = vmatpush1.bf16.msra.mxu0 %v1081
        %1137 = vmatprep.subr.bf16.mxu0 0
        %1138 = vmatpush1.bf16.msra.mxu0 %v1082
        %1139 = vmatprep.subr.bf16.mxu0 0
        %1140 = vmatpush1.bf16.msra.mxu0 %v1083
        %1141 = vmatprep.subr.bf16.mxu0 0
        %1142 = vmatpush1.bf16.msra.mxu0 %v1084
        %1143 = vmatprep.subr.bf16.mxu0 0
        %1144 = vmatpush1.bf16.msra.mxu0 %v1085
        %1145 = vmatprep.subr.bf16.mxu0 0
        %1146 = vmatpush1.bf16.msra.mxu0 %v1086
        %1147 = vmatprep.subr.bf16.mxu0 0
        %1148 = vmatpush1.bf16.msra.mxu0 %v1087
        %1149 = vmatprep.subr.bf16.mxu0 0
        %1150 = vmatpush1.bf16.msra.mxu0 %v1088
        %1151 = vmatprep.subr.bf16.mxu0 0
        %1152 = vmatpush1.bf16.msra.mxu0 %v1089
        %1153 = vmatprep.subr.bf16.mxu0 0
        %1154 = vmatpush1.bf16.msra.mxu0 %v1090
        %1155 = vmatprep.mubr.bf16.mxu0 %v929
        %1156 = vmatmul.mubr.bf16.gmra.mrb[0].mxu0 %v928
        %v1157 = vpop.f32.mrb[0].mxu0
        %v1158 = vadd.f32 0.0, %v1157
        %v1159 = vpop.f32.mrb[0].mxu0
        %v1160 = vpop.f32.mrb[0].mxu0
        %v1161 = vadd.f32 0.0, %v1160
        %v1162 = vpop.f32.mrb[0].mxu0
        %1163 = vdwg.mxu0
        %1164 = vmatprep.subr.bf16.mxu0 0
        %1165 = vmatpush1.bf16.msra.mxu0 %v1091
        %1166 = vmatprep.subr.bf16.mxu0 0
        %1167 = vmatpush1.bf16.msra.mxu0 %v1092
        %1168 = vmatprep.subr.bf16.mxu0 0
        %1169 = vmatpush1.bf16.msra.mxu0 %v1093
        %1170 = vmatprep.subr.bf16.mxu0 0
        %1171 = vmatpush1.bf16.msra.mxu0 %v1094
        %1172 = vmatprep.subr.bf16.mxu0 0
        %1173 = vmatpush1.bf16.msra.mxu0 %v1095
        %1174 = vmatprep.subr.bf16.mxu0 0
        %1175 = vmatpush1.bf16.msra.mxu0 %v1096
        %1176 = vmatprep.subr.bf16.mxu0 0
        %1177 = vmatpush1.bf16.msra.mxu0 %v1097
        %1178 = vmatprep.subr.bf16.mxu0 0
        %1179 = vmatpush1.bf16.msra.mxu0 %v1098
        %1180 = vmatprep.subr.bf16.mxu0 0
        %1181 = vmatpush1.bf16.msra.mxu0 0
        %1182 = vmatprep.subr.bf16.mxu0 0
        %1183 = vmatpush1.bf16.msra.mxu0 0
        %1184 = vmatprep.subr.bf16.mxu0 0
        %1185 = vmatpush1.bf16.msra.mxu0 0
        %1186 = vmatprep.subr.bf16.mxu0 0
        %1187 = vmatpush1.bf16.msra.mxu0 0
        %1188 = vmatprep.subr.bf16.mxu0 0
        %1189 = vmatpush1.bf16.msra.mxu0 0
        %1190 = vmatprep.subr.bf16.mxu0 0
        %1191 = vmatpush1.bf16.msra.mxu0 0
        %1192 = vmatprep.subr.bf16.mxu0 0
        %1193 = vmatpush1.bf16.msra.mxu0 0
        %1194 = vmatprep.subr.bf16.mxu0 0
        %1195 = vmatpush1.bf16.msra.mxu0 0
        %1196 = vmatprep.mubr.bf16.mxu0 0
        %1197 = vmatmul.mubr.bf16.gmra.mrb[0].mxu0 %v930
        %v1198 = vpop.f32.mrb[0].mxu0
        %v1199 = vadd.f32 %v1158, %v1198
        %v1200 = vpop.f32.mrb[0].mxu0
        %v1201 = vpop.f32.mrb[0].mxu0
        %v1202 = vadd.f32 %v1161, %v1201
        %v1203 = vpop.f32.mrb[0].mxu0
        %1204 = vdwg.mxu0
        %v1205 = vadd.f32 %v926, %v1199
        %v1206 = vadd.f32 %v927, %v1202
        %1207 = vst [vmem:[#allocation2] sm:$0xff] %v1205
        %1208 = vst [vmem:[#allocation2 + $0x8] sm:$0xff] %v1206
        %p1209 = scmp.eq.s32.totalorder %s30, 1
        // Predicated region
        $region65: #{tpu_custom_call.1} parent=43 // pred_check
          %p1210 = pneg %p1209
        $region66: #{tpu_custom_call.1} parent=43 // pred_check_branch
          %1212 = sbr.rel (%p1210) target = $region68
        $region67: #{tpu_custom_call.1} parent=43 // pred_region
          %v1213 = vld [vmem:[#allocation3] sm:$0xff]
          %v1214 = vld [vmem:[#allocation3 + $0x8] sm:$0xff]
          %v1215 = vld [vmem:[#allocation2] sm:$0xff]
          %v1216 = vld [vmem:[#allocation2 + $0x8] sm:$0xff]
          %v1217 = vadd.f32 %v1213, %v1215
          %v1218 = vadd.f32 %v1214, %v1216
          %v1219 = vlaneseq
          %v1220 = vand.u32 %v1219, 127
          %vm1221 = vcmp.lt.s32.totalorder %v1220, 32
          %v1222 = vsel %vm1221, 1, 0
          %v1223 = vcvt.s32.f32 %v1222
          %1224 = vadd.xlane.f32.xlu0 %v1217
          %v1225 = vpop.xlane.xlu0 %1224
          %1226 = vadd.xlane.f32.xlu0 %v1218
          %v1227 = vpop.xlane.xlu0 %1226
          %v1228 = vmul.f32 %v1225, 0.03125
          %v1229 = vmul.f32 %v1227, 0.03125
          %v1230 = vsub.f32 %v1217, %v1228
          %v1231 = vsub.f32 %v1218, %v1229
          %v1232 = vmul.f32 %v1230, %v1223
          %v1233 = vmul.f32 %v1231, %v1223
          %v1234 = vmul.f32 %v1232, %v1232
          %v1235 = vmul.f32 %v1233, %v1233
          %1236 = vadd.xlane.f32.xlu0 %v1234
          %v1237 = vpop.xlane.xlu0 %1236
          %1238 = vadd.xlane.f32.xlu0 %v1235
          %v1239 = vpop.xlane.xlu0 %1238
          %v1240 = vmul.f32 %v1237, 0.03125
          %v1241 = vmul.f32 %v1239, 0.03125
          %v1242 = vadd.f32 %v1240, 1e-05
          %v1243 = vadd.f32 %v1241, 1e-05
          %v1244 = vrsqrt.pop %v1242
          %v1245 = vrsqrt.pop %v1243
          %v1246 = vmul.f32 %v1230, %v1244
          %v1247 = vmul.f32 %v1231, %v1245
          %v1248 = vld [vmem:[%s4] sm:$0x1]
          %v1250 = vlaneseq
          %v1251 = vshrl.u32 %v1250, 7
          %v1252 = vsub.s32 0, %v1251
          %v1253 = vrot.slane %v1248, %v1252
          %v1255 = vmul.f32 %v1246, %v1253
          %v1256 = vmul.f32 %v1247, %v1253
          %v1257 = vld [vmem:[%s5] sm:$0x1]
          %v1259 = vlaneseq
          %v1260 = vshrl.u32 %v1259, 7
          %v1261 = vsub.s32 0, %v1260
          %v1262 = vrot.slane %v1257, %v1261
          %v1264 = vadd.f32 %v1255, %v1262
          %v1265 = vadd.f32 %v1256, %v1262
          %1266 = vst [vmem:[#allocation11] sm:$0xff] %v1264
          %1267 = vst [vmem:[#allocation11 + $0x8] sm:$0xff] %v1265
        $region68: #{tpu_custom_call.1} parent=43 // pred_fallthru
          _
        // Predicated region
        $region69: #{tpu_custom_call.1} parent=43 // pred_check
          %p1268 = pneg %p201
        $region70: #{tpu_custom_call.1} parent=43 // pred_check_branch
          %1270 = sbr.rel (%p1268) target = $region72
        $region71: #{tpu_custom_call.1} parent=43 // pred_region
          %s1271 = smul.u32 2, %s29
          %s1273 = ssub.s32 256, 256
          %1274 = vsyncadd [#allocation5], %s1273
          %s1275 = smul.addr %s1271, 128
          %s1276 = scalar_lea.hbm %s6, %s1275
          %s1277 = sshll.u32 [#allocation11], 4
          %s1278 = int_to_ptr.vmem [resolvable:$true] %s1277
          %1283 = dma.vmem_to_hbm [thread:$0]  %s1278, 256, %s1276, [#allocation5], 128, 128, 8
        $region72: #{tpu_custom_call.1} parent=43 // pred_fallthru
          _
        // Predicated region
        $region73: #{tpu_custom_call.1} parent=43 // pred_check
          %p1284 = pneg %p201
        $region74: #{tpu_custom_call.1} parent=43 // pred_check_branch
          %1286 = sbr.rel (%p1284) target = $region76
        $region75: #{tpu_custom_call.1} parent=43 // pred_region
          %1287 = dma.done [#allocation5], 256
        $region76: #{tpu_custom_call.1} parent=43 // pred_fallthru
          _
      $region44: #{tpu_custom_call.1} parent=5 // pred_fallthru
        _
      %p1288 = scmp.le.s32.totalorder 2, %s20
      // Predicated region
      $region77: #{tpu_custom_call.1} parent=5 // pred_check
        %p1289 = pneg %p1288
      $region78: #{tpu_custom_call.1} parent=5 // pred_check_branch
        %1291 = sbr.rel (%p1289) target = $region80
      $region79: #{tpu_custom_call.1} parent=5 // pred_region
        %s1292 = ssub.s32 %s20, 2
      $region80: #{tpu_custom_call.1} parent=5 // pred_fallthru
        _
    $region6: #{tpu_custom_call.1} parent=1 // loop_footer
      %s24 = sadd.s32 1, %s20
    $region7: #{tpu_custom_call.1} parent=1 // loop_footer_branch
      %19 = sbr.rel target = $region3
    $region8: #{tpu_custom_call.1} parent=1 // loop_exit
      _
    %1293 = vsyncpa [#allocation4], 1
    %s1294 = scalar_lea.sflag [#allocation4], 1
    %1295 = vsyncpa %s1294, 1
    %1296 = vsyncpa [#allocation7], 1
    %s1297 = scalar_lea.sflag [#allocation7], 1
    %1298 = vsyncpa %s1297, 1
    %1299 = vsyncpa [#allocation10], 1
    %s1300 = scalar_lea.sflag [#allocation10], 1
    %1301 = vsyncpa %s1300, 1
    %1302 = vsyncpa [#allocation5], 1
    %s1303 = scalar_lea.sflag [#allocation5], 1
    %1304 = vsyncpa %s1303, 1

</llo_original>
